<compile_context>
chip_gen: v7x
topology: tpu7x:2x2x1
jax: 0.10.0
libtpu: 0.0.40
codegen_flags: <defaults>
</compile_context>

<pallas_src>
import math

import jax
import jax.numpy as jnp
from jax.experimental import pallas as pl
from jax.experimental.pallas import tpu as pltpu


# ----------------------------------------------------------------------------
# Kernel 1: style_eff = w @ wt_eff + bias_eff
#   wt_eff   = W.T * weight_mul            (lane-padded, precomputed)
#   bias_eff = bias * bias_mul + [1..1,0..0]  ("+1" folded for the scale half)
# ----------------------------------------------------------------------------
def _style_linear_kernel(w_ref, wt_ref, b_ref, o_ref):
    acc = jnp.dot(w_ref[...], wt_ref[...], preferred_element_type=jnp.float32)
    o_ref[...] = (acc + b_ref[...]).astype(o_ref.dtype)


def _style_linear(w, params):
    """Returns style_eff (N, 2C) float32 where
       style_eff[:, :C] = scale + 1   and   style_eff[:, C:] = shift."""
    N, D = w.shape
    O = params["out_features"]          # = 2C
    O_pad = params["o_pad"]
    wt_eff = params["wt_eff"]           # (D, O_pad) f32, weight_mul folded in
    bias_eff = params["bias_eff"]       # (1, O_pad) f32, "+1" folded in

    out = pl.pallas_call(
        _style_linear_kernel,
        out_shape=jax.ShapeDtypeStruct((N, O_pad), jnp.float32),
        grid_spec=pltpu.PrefetchScalarGridSpec(
            num_scalar_prefetch=0,
            grid=(1,),
            in_specs=[
                pl.BlockSpec((N, D), lambda i: (0, 0)),
                pl.BlockSpec((D, O_pad), lambda i: (0, 0)),
                pl.BlockSpec((1, O_pad), lambda i: (0, 0)),
            ],
            out_specs=pl.BlockSpec((N, O_pad), lambda i: (0, 0)),
        ),
        compiler_params=pltpu.CompilerParams(
            dimension_semantics=("arbitrary",)),
        cost_estimate=pl.CostEstimate(
            flops=2 * N * D * O,
            transcendentals=0,
            bytes_accessed=4 * (N * D + D * O + N * O)),
    )(w.astype(jnp.float32), wt_eff, bias_eff)
    return out[:, :O]


# ----------------------------------------------------------------------------
# Kernel 2a (HW >= 128): per-row modulation over the (N*C, H*W) view.
#   side[:, 0] = scale + 1,  side[:, 1] = shift
# ----------------------------------------------------------------------------
def _modulate_rows_kernel(x_ref, side_ref, o_ref):
    xv = x_ref[...].astype(jnp.float32)
    side = side_ref[...]
    s = side[:, 0:1]
    t = side[:, 1:2]
    o_ref[...] = (xv * s + t).astype(o_ref.dtype)


# ~2 MiB x-tile: >=85% of measured HBM roofline, amortizes the ~0.35 us
# per-grid-step overhead (matters most on v7x), and 2x(in)+2x(out) double
# buffers (~8 MiB) stay under v5e's 16 MiB scoped-VMEM default.
_TARGET_TILE_BYTES = 2 * 1024 * 1024


def _choose_row_tiles(NC, HW, itemsize):
    target = _TARGET_TILE_BYTES // itemsize                 # elems per x tile
    # Prefer TN == HW: a (TM, HW) tile of the row-major (NC, HW) view is a
    # single contiguous HBM burst per tile.
    max_tn = max(128, (target // 8) // 128 * 128)           # 8-row tile fits budget
    TN = HW if HW <= max_tn else max_tn
    TM = max(8, (target // TN) // 8 * 8)
    if TM >= NC:
        TM = NC
    grid_m, grid_n = pl.cdiv(NC, TM), pl.cdiv(HW, TN)
    # v7x has 2 TensorCores: a (1,1) grid on a big-enough problem idles one.
    if grid_m == 1 and grid_n == 1 and NC * HW * itemsize >= (1 << 20):
        if NC >= 16:
            TM = (((NC + 1) // 2 + 7) // 8) * 8
        elif HW >= 256:
            TN = (((HW + 1) // 2 + 127) // 128) * 128
        grid_m, grid_n = pl.cdiv(NC, TM), pl.cdiv(HW, TN)
    return TM, TN, (grid_m, grid_n)


def _modulate_rows(x2, side):
    NC, HW = x2.shape
    itemsize = jnp.dtype(x2.dtype).itemsize
    TM, TN, grid = _choose_row_tiles(NC, HW, itemsize)

    return pl.pallas_call(
        _modulate_rows_kernel,
        out_shape=jax.ShapeDtypeStruct((NC, HW), x2.dtype),
        grid_spec=pltpu.PrefetchScalarGridSpec(
            num_scalar_prefetch=0,
            grid=grid,
            in_specs=[
                pl.BlockSpec((TM, TN), lambda i, j: (i, j)),
                pl.BlockSpec((TM, 2), lambda i, j: (i, 0)),
            ],
            out_specs=pl.BlockSpec((TM, TN), lambda i, j: (i, j)),
        ),
        compiler_params=pltpu.CompilerParams(
            dimension_semantics=("parallel", "parallel")),
        cost_estimate=pl.CostEstimate(
            flops=2 * NC * HW,
            transcendentals=0,
            bytes_accessed=2 * NC * HW * itemsize + 8 * NC),
    )(x2, side)


# ----------------------------------------------------------------------------
# Kernel 2b (HW < 128): channel+spatial folded into lanes; dense scale/shift.
# ----------------------------------------------------------------------------
def _modulate_dense_kernel(x_ref, s_ref, t_ref, o_ref):
    xv = x_ref[...].astype(jnp.float32)
    o_ref[...] = (xv * s_ref[...] + t_ref[...]).astype(o_ref.dtype)


def _modulate_dense(x2, s2, t2):
    R, L = x2.shape
    itemsize = jnp.dtype(x2.dtype).itemsize
    # Three inputs + one output are tiled identically -> ~1 MiB per operand.
    target = (1024 * 1024) // 4
    max_tn = max(128, (target // 8) // 128 * 128)
    TN = L if L <= max_tn else max_tn
    TM = max(8, (target // TN) // 8 * 8)
    if TM >= R:
        TM = R
    grid = (pl.cdiv(R, TM), pl.cdiv(L, TN))

    return pl.pallas_call(
        _modulate_dense_kernel,
        out_shape=jax.ShapeDtypeStruct((R, L), x2.dtype),
        grid_spec=pltpu.PrefetchScalarGridSpec(
            num_scalar_prefetch=0,
            grid=grid,
            in_specs=[
                pl.BlockSpec((TM, TN), lambda i, j: (i, j)),
                pl.BlockSpec((TM, TN), lambda i, j: (i, j)),
                pl.BlockSpec((TM, TN), lambda i, j: (i, j)),
            ],
            out_specs=pl.BlockSpec((TM, TN), lambda i, j: (i, j)),
        ),
        compiler_params=pltpu.CompilerParams(
            dimension_semantics=("parallel", "parallel")),
        cost_estimate=pl.CostEstimate(
            flops=2 * R * L,
            transcendentals=0,
            bytes_accessed=(2 * itemsize + 8) * R * L),
    )(x2, s2, t2)


# ----------------------------------------------------------------------------
# StyleMixin: parameter construction (mirrors PyTorch __init__) + forward
# ----------------------------------------------------------------------------
def prepare_style_mixin(params):
    """Precompute forward-path constants (call once per weight/bias update):
       wt_eff   = (W.T * weight_mul), lane-padded to a multiple of 128
       bias_eff = bias * bias_mul + [1..1, 0..0]  (the "+1" for the scale half)"""
    C = params["num_channels"]
    O = 2 * C
    weight = params["weight"].astype(jnp.float32)
    wt_eff = weight.T * jnp.float32(params["weight_mul"])            # (D, 2C)
    plus_one = jnp.concatenate([jnp.ones((C,), jnp.float32),
                                jnp.zeros((C,), jnp.float32)])
    bias_eff = (params["bias"].astype(jnp.float32)
                * jnp.float32(params["bias_mul"]) + plus_one)        # (2C,)

    O_pad = max(128, ((O + 127) // 128) * 128)
    if O_pad != O:
        wt_eff = jnp.pad(wt_eff, ((0, 0), (0, O_pad - O)))
        bias_eff = jnp.pad(bias_eff, (0, O_pad - O))

    out = dict(params)
    out.update(out_features=O, o_pad=O_pad, wt_eff=wt_eff,
               bias_eff=bias_eff.reshape(1, O_pad))
    return out


def make_style_mixin(key, dlatent_size, num_channels, use_wscale=True, lrmul=1.0):
    """EqualizedLinear(dlatent_size, 2*num_channels, gain=1.0, bias init 0)."""
    out_feat = 2 * num_channels
    weight = jax.random.normal(key, (out_feat, dlatent_size), jnp.float32)
    if use_wscale:
        weight = weight / lrmul
        weight_mul = 1.0 * math.sqrt(1.0 / dlatent_size) * lrmul   # gain = 1.0
        bias_mul = lrmul
    else:
        weight_mul = 1.0
        bias_mul = 1.0
    bias = jnp.zeros((out_feat,), jnp.float32)
    raw = dict(weight=weight, bias=bias, weight_mul=weight_mul,
               bias_mul=bias_mul, num_channels=num_channels)
    return prepare_style_mixin(raw)


def style_mixin_forward(params, x, w):
    """x: (N, C, *spatial) activation, w: (N, dlatent) latent."""
    N, C = x.shape[0], x.shape[1]
    HW = 1
    for s in x.shape[2:]:
        HW *= s

    # style_eff[:, :C] = scale + 1 ; style_eff[:, C:] = shift   (f32, N x 2C)
    style_eff = _style_linear(w, params)
    scale1 = style_eff[:, :C]
    shift = style_eff[:, C:]

    if HW >= 128:
        # Lane-dense rows of the NCHW storage: x viewed as (N*C, HW).
        side = jnp.stack([scale1.reshape(-1), shift.reshape(-1)], axis=-1)
        x2 = x.reshape(N * C, HW)
        out = _modulate_rows(x2, side)
    else:
        # Early layers (4x4/8x8): fold channel+spatial into the lane axis so
        # stores stay lane-dense; dense per-element scale/shift rows are cheap
        # at these sizes.
        L = C * HW
        s2 = jnp.broadcast_to(scale1[:, :, None], (N, C, HW)).reshape(N, L)
        t2 = jnp.broadcast_to(shift[:, :, None], (N, C, HW)).reshape(N, L)
        x2 = x.reshape(N, L)
        out = _modulate_dense(x2, s2, t2)

    return out.reshape(x.shape)


# ----------------------------------------------------------------------------
# Pure-JAX reference (mirrors the PyTorch forward exactly)
# ----------------------------------------------------------------------------
def _ref_style_mixin(params, x, w):
    style = (w @ params["weight"].T) * params["weight_mul"] \
            + params["bias"] * params["bias_mul"]
    N, C = x.shape[0], x.shape[1]
    style = style.reshape((N, 2, C) + (1,) * (x.ndim - 2))
    return x * (style[:, 0] + 1.0) + style[:, 1]


if __name__ == "__main__":
    key = jax.random.PRNGKey(0)
    k_x, k_w, k_lat, k_b, k_x2 = jax.random.split(key, 5)

    # Small shapes consistent with the module: batch=2, channels=4,
    # spatial=16x16, dlatent=32.
    N, C, H, W_sp, D = 2, 4, 16, 16, 32
    x = jax.random.normal(k_x, (N, C, H, W_sp), jnp.float32)
    lat = jax.random.normal(k_lat, (N, D), jnp.float32)

    params = make_style_mixin(k_w, dlatent_size=D, num_channels=C,
                              use_wscale=True)

    # Path A: HW = 256 >= 128 (lane-dense row-wise modulation kernel).
    y = jax.block_until_ready(style_mixin_forward(params, x, lat))
    assert y.shape == x.shape
    y_ref = _ref_style_mixin(params, x, lat)
    assert jnp.allclose(y, y_ref, atol=1e-4, rtol=1e-4)

    # Non-zero bias (re-prepare folded constants once, as after a train step).
    params_b = prepare_style_mixin(
        {**params, "bias": 0.1 * jax.random.normal(k_b, (2 * C,), jnp.float32)})
    y2 = jax.block_until_ready(style_mixin_forward(params_b, x, lat))
    assert jnp.allclose(y2, _ref_style_mixin(params_b, x, lat),
                        atol=1e-4, rtol=1e-4)

    # Path B: early-layer 4x4 spatial (HW < 128) -> channels+spatial folded
    # into the lane axis.
    x_small = jax.random.normal(k_x2, (N, C, 4, 4), jnp.float32)
    y3 = jax.block_until_ready(style_mixin_forward(params_b, x_small, lat))
    assert jnp.allclose(y3, _ref_style_mixin(params_b, x_small, lat),
                        atol=1e-4, rtol=1e-4)

    print("KERNEL_OK")
</pallas_src>

<mosaic_0001>
module attributes {stable_mosaic.version = 11 : i64} {
  func.func @_style_linear_kernel(%arg0: i32, %arg1: memref<2x32xf32, #tpu.memory_space<vmem>>, %arg2: memref<32x128xf32, #tpu.memory_space<vmem>>, %arg3: memref<1x128xf32, #tpu.memory_space<vmem>>, %arg4: memref<2x128xf32, #tpu.memory_space<vmem>>) attributes {dimension_semantics = [#tpu.dimension_semantics<arbitrary>], iteration_bounds = array<i64: 1>, scalar_prefetch = 0 : i64, scratch_operands = 0 : i64, tpu.core_type = #tpu.core_type<tc>, window_params = [{pipeline_mode = #tpu.pipeline_mode<synchronous>, transform_indices = @transform_0, window_bounds = array<i64: 2, 32>}, {pipeline_mode = #tpu.pipeline_mode<synchronous>, transform_indices = @transform_1, window_bounds = array<i64: 32, 128>}, {pipeline_mode = #tpu.pipeline_mode<synchronous>, transform_indices = @transform_2, window_bounds = array<i64: 1, 128>}, {pipeline_mode = #tpu.pipeline_mode<synchronous>, transform_indices = @transform_3, window_bounds = array<i64: 2, 128>}]} {
    %c0 = arith.constant 0 : index
    %c0_0 = arith.constant 0 : index
    %0 = vector.load %arg1[%c0, %c0_0] : memref<2x32xf32, #tpu.memory_space<vmem>>, vector<2x32xf32>
    %c0_1 = arith.constant 0 : index
    %c0_2 = arith.constant 0 : index
    %1 = vector.load %arg2[%c0_1, %c0_2] : memref<32x128xf32, #tpu.memory_space<vmem>>, vector<32x128xf32>
    %cst = arith.constant dense<0.000000e+00> : vector<2x128xf32>
    %2 = tpu.matmul %0, %1, %cst {dimension_numbers = #tpu.dot_dimension_numbers<[1], [0], [0], [1], [0, 0, 1, 1], [], []>} : vector<2x32xf32>, vector<32x128xf32>, vector<2x128xf32> -> vector<2x128xf32>
    %c0_3 = arith.constant 0 : index
    %c0_4 = arith.constant 0 : index
    %3 = vector.load %arg3[%c0_3, %c0_4] : memref<1x128xf32, #tpu.memory_space<vmem>>, vector<1x128xf32>
    %4 = vector.broadcast %3 : vector<1x128xf32> to vector<2x128xf32>
    %5 = arith.addf %2, %4 : vector<2x128xf32>
    %c0_5 = arith.constant 0 : index
    %c0_6 = arith.constant 0 : index
    %6 = vector.load %arg4[%c0_5, %c0_6] : memref<2x128xf32, #tpu.memory_space<vmem>>, vector<2x128xf32>
    tpu.vector_store %arg4[%c0_5, %c0_6], %5 {strides = array<i32>} : memref<2x128xf32, #tpu.memory_space<vmem>>, vector<2x128xf32>,
    return
  }
  func.func @transform_0(%arg0: i32) -> (i32, i32) {
    %c0_i32 = arith.constant 0 : i32
    %c0_i32_0 = arith.constant 0 : i32
    %c0_i32_1 = arith.constant 0 : i32
    return %c0_i32, %c0_i32_0 : i32, i32
  }
  func.func @transform_1(%arg0: i32) -> (i32, i32) {
    %c0_i32 = arith.constant 0 : i32
    %c0_i32_0 = arith.constant 0 : i32
    %c0_i32_1 = arith.constant 0 : i32
    return %c0_i32, %c0_i32_0 : i32, i32
  }
  func.func @transform_2(%arg0: i32) -> (i32, i32) {
    %c0_i32 = arith.constant 0 : i32
    %c0_i32_0 = arith.constant 0 : i32
    %c0_i32_1 = arith.constant 0 : i32
    return %c0_i32, %c0_i32_0 : i32, i32
  }
  func.func @transform_3(%arg0: i32) -> (i32, i32) {
    %c0_i32 = arith.constant 0 : i32
    %c0_i32_0 = arith.constant 0 : i32
    %c0_i32_1 = arith.constant 0 : i32
    return %c0_i32, %c0_i32_0 : i32, i32
  }
}

</mosaic_0001>

<llo_original>
// kernel: tpu_custom_call.1
$region0: #{tpu_custom_call.1}
  #allocation0 [shape = 'u32[]', space=smem, size = 0x4, offset = 0x4, fixed_abs, tag = 'smem constant byte address 0x4 - core index']
  #allocation1 [shape = 'u32[144,128]{1,0:T(1,128)}', space=vmem, size = 0x12000, scoped, tag = 'internal scratch']
  %s0 = inlined_call_operand.hbm [shape: f32[2,32], index: 0, kind: input, shape index: {}]
  %s1 = inlined_call_operand.hbm [shape: f32[32,128], index: 1, kind: input, shape index: {}]
  %s2 = inlined_call_operand.vmem [shape: f32[1,128], index: 2, kind: input, shape index: {}]
  %s3 = inlined_call_operand.hbm [shape: f32[2,128], index: 3, kind: output, shape index: {}]
  %s4 = sld [smem:[#allocation0]]
  $region30: #{tpu_custom_call.1} parent=0
    _
  %s6 = ssub.s32 1, %s4
  %s7 = scalar_select 0, %s6, %s4
  $region1: #{tpu_custom_call.1} parent=0
    #allocation2 [shape = 'u8[1024]{0}', space=vmem, size = 0x400, scoped, tag = 'input window, operand 0, single buffered']
    #allocation3 [shape = 's32[1]{0}', space=sflag, size = 0x4, scoped, tag = 'scoped memory for tpu_custom_call.1']
    #allocation4 [shape = 's32[1]{0}', space=sflag, size = 0x4, scoped, tag = 'scoped memory for tpu_custom_call.1']
    #allocation5 [shape = 'u8[16384]{0}', space=vmem, size = 0x4000, scoped, tag = 'input window, operand 1, single buffered']
    #allocation6 [shape = 's32[1]{0}', space=sflag, size = 0x4, scoped, tag = 'scoped memory for tpu_custom_call.1']
    #allocation7 [shape = 'u8[1024]{0}', space=vmem, size = 0x400, scoped, tag = 'output window, operand 0, single buffered']
    %8 = vsyncpa [#allocation3], 0
    %9 = vsyncpa [#allocation6], 0
    %10 = vsyncpa [#allocation4], 0
    // Predicated region
    $region2: #{tpu_custom_call.1} parent=1 // pred_check
      _
    $region3: #{tpu_custom_call.1} parent=1 // pred_check_branch
      %12 = sbr.rel (0) target = $region5
    $region4: #{tpu_custom_call.1} parent=1 // pred_region
      %s14 = ssub.s32 32, 32
      %15 = vsyncadd [#allocation3], %s14
      %s17 = sshll.u32 [#allocation2], 4
      %s18 = int_to_ptr.vmem [resolvable:$true] %s17
      %20 = dma.hbm_to_vmem [thread:$0]  %s0, 32, %s18, [#allocation3]
    $region5: #{tpu_custom_call.1} parent=1 // pred_fallthru
      _
    // Predicated region
    $region6: #{tpu_custom_call.1} parent=1 // pred_check
      _
    $region7: #{tpu_custom_call.1} parent=1 // pred_check_branch
      %22 = sbr.rel (0) target = $region9
    $region8: #{tpu_custom_call.1} parent=1 // pred_region
      %s24 = ssub.s32 512, 512
      %25 = vsyncadd [#allocation6], %s24
      %s26 = sshll.u32 [#allocation5], 4
      %s27 = int_to_ptr.vmem [resolvable:$true] %s26
      %32 = dma.hbm_to_vmem [thread:$0]  %s1, 512, %s27, [#allocation6], 128, 128, 8
    $region9: #{tpu_custom_call.1} parent=1 // pred_fallthru
      _
    // Predicated region
    $region10: #{tpu_custom_call.1} parent=1 // pred_check
      _
    $region11: #{tpu_custom_call.1} parent=1 // pred_check_branch
      %34 = sbr.rel (0) target = $region13
    $region12: #{tpu_custom_call.1} parent=1 // pred_region
      _
    $region13: #{tpu_custom_call.1} parent=1 // pred_fallthru
      _
    // Predicated region
    $region14: #{tpu_custom_call.1} parent=1 // pred_check
      _
    $region15: #{tpu_custom_call.1} parent=1 // pred_check_branch
      %36 = sbr.rel (0) target = $region17
    $region16: #{tpu_custom_call.1} parent=1 // pred_region
      %37 = dma.done [#allocation3], 32
    $region17: #{tpu_custom_call.1} parent=1 // pred_fallthru
      _
    // Predicated region
    $region18: #{tpu_custom_call.1} parent=1 // pred_check
      _
    $region19: #{tpu_custom_call.1} parent=1 // pred_check_branch
      %39 = sbr.rel (0) target = $region21
    $region20: #{tpu_custom_call.1} parent=1 // pred_region
      %40 = dma.done [#allocation6], 512
    $region21: #{tpu_custom_call.1} parent=1 // pred_fallthru
      _
    %v41 = vld [vmem:[#allocation2] sm:$0x3]
    %v42 = vld [vmem:[#allocation5] sm:$0xff]
    %v43 = vld [vmem:[#allocation5 + $0x8] sm:$0xff]
    %v44 = vld [vmem:[#allocation5 + $0x10] sm:$0xff]
    %v45 = vld [vmem:[#allocation5 + $0x18] sm:$0xff]
    %v46 = vld [vmem:[%s2] sm:$0x1]
    %v48 = vlaneseq
    %v49 = vshrl.u32 %v48, 7
    %v50 = vsub.s32 0, %v49
    %v51 = vrot.slane %v46, %v50
    %vm53 = vcmask 261120
    %v55 = vsel %vm53, %v41, 0
    %57 = vmatprep.subr.mxu0 0.0
    %58 = vmatpush1.msra.mxu0 %v42
    %59 = vmatprep.subr.mxu0 0.0
    %60 = vmatpush1.msra.mxu0 %v43
    %61 = vmatprep.subr.mxu0 0.0
    %62 = vmatpush1.msra.mxu0 %v44
    %63 = vmatprep.subr.mxu0 0.0
    %64 = vmatpush1.msra.mxu0 %v45
    %65 = vmatprep.subr.mxu0 0.0
    %66 = vmatpush1.msra.mxu0 0.0
    %67 = vmatprep.subr.mxu0 0.0
    %68 = vmatpush1.msra.mxu0 0.0
    %69 = vmatprep.subr.mxu0 0.0
    %70 = vmatpush1.msra.mxu0 0.0
    %71 = vmatprep.subr.mxu0 0.0
    %72 = vmatpush1.msra.mxu0 0.0
    %73 = vmatprep.subr.mxu0 0.0
    %74 = vmatpush1.msra.mxu0 0.0
    %75 = vmatprep.subr.mxu0 0.0
    %76 = vmatpush1.msra.mxu0 0.0
    %77 = vmatprep.subr.mxu0 0.0
    %78 = vmatpush1.msra.mxu0 0.0
    %79 = vmatprep.subr.mxu0 0.0
    %80 = vmatpush1.msra.mxu0 0.0
    %81 = vmatprep.subr.mxu0 0.0
    %82 = vmatpush1.msra.mxu0 0.0
    %83 = vmatprep.subr.mxu0 0.0
    %84 = vmatpush1.msra.mxu0 0.0
    %85 = vmatprep.subr.mxu0 0.0
    %86 = vmatpush1.msra.mxu0 0.0
    %87 = vmatprep.subr.mxu0 0.0
    %88 = vmatpush1.msra.mxu0 0.0
    %89 = vmatprep.subr.mxu0 0.0
    %90 = vmatpush1.msra.mxu0 0.0
    %91 = vmatprep.subr.mxu0 0.0
    %92 = vmatpush1.msra.mxu0 0.0
    %93 = vmatprep.subr.mxu0 0.0
    %94 = vmatpush1.msra.mxu0 0.0
    %95 = vmatprep.subr.mxu0 0.0
    %96 = vmatpush1.msra.mxu0 0.0
    %97 = vmatprep.subr.mxu0 0.0
    %98 = vmatpush1.msra.mxu0 0.0
    %99 = vmatprep.subr.mxu0 0.0
    %100 = vmatpush1.msra.mxu0 0.0
    %101 = vmatprep.subr.mxu0 0.0
    %102 = vmatpush1.msra.mxu0 0.0
    %103 = vmatprep.subr.mxu0 0.0
    %104 = vmatpush1.msra.mxu0 0.0
    %105 = vmatprep.subr.mxu0 0.0
    %106 = vmatpush1.msra.mxu0 0.0
    %107 = vmatprep.subr.mxu0 0.0
    %108 = vmatpush1.msra.mxu0 0.0
    %109 = vmatprep.subr.mxu0 0.0
    %110 = vmatpush1.msra.mxu0 0.0
    %111 = vmatprep.subr.mxu0 0.0
    %112 = vmatpush1.msra.mxu0 0.0
    %113 = vmatprep.subr.mxu0 0.0
    %114 = vmatpush1.msra.mxu0 0.0
    %115 = vmatprep.subr.mxu0 0.0
    %116 = vmatpush1.msra.mxu0 0.0
    %117 = vmatprep.subr.mxu0 0.0
    %118 = vmatpush1.msra.mxu0 0.0
    %119 = vmatprep.subr.mxu0 0.0
    %120 = vmatpush1.msra.mxu0 0.0
    %121 = vmatprep.mubr.f32.mxu0 0.0
    %122 = vmatmul.mubr.f32.gmra.mrb[0].mxu0 %v55
    %v123 = vpop.f32.mrb[0].mxu0
    %v124 = vadd.f32 %v51, %v123
    %v125 = vpop.f32.mrb[0].mxu0
    %126 = vdwg.mxu0
    %127 = vst [vmem:[#allocation7] sm:$0x3] %v124
    // Predicated region
    $region22: #{tpu_custom_call.1} parent=1 // pred_check
      _
    $region23: #{tpu_custom_call.1} parent=1 // pred_check_branch
      %129 = sbr.rel (0) target = $region25
    $region24: #{tpu_custom_call.1} parent=1 // pred_region
      %s131 = ssub.s32 32, 32
      %132 = vsyncadd [#allocation4], %s131
      %s134 = sshll.u32 [#allocation7], 4
      %s135 = int_to_ptr.vmem [resolvable:$true] %s134
      %137 = dma.vmem_to_hbm [thread:$0]  %s135, 32, %s3, [#allocation4]
    $region25: #{tpu_custom_call.1} parent=1 // pred_fallthru
      _
    // Predicated region
    $region26: #{tpu_custom_call.1} parent=1 // pred_check
      _
    $region27: #{tpu_custom_call.1} parent=1 // pred_check_branch
      %139 = sbr.rel (0) target = $region29
    $region28: #{tpu_custom_call.1} parent=1 // pred_region
      %140 = dma.done [#allocation4], 32
    $region29: #{tpu_custom_call.1} parent=1 // pred_fallthru
      _
    %141 = vsyncpa [#allocation3], 1
    %142 = vsyncpa [#allocation6], 1
    %143 = vsyncpa [#allocation4], 1

</llo_original>
